<compile_context>
chip_gen: v6e
topology: v6e:2x2x1
jax: 0.10.0
libtpu: 0.0.40
codegen_flags: <defaults>
</compile_context>

<pallas_src>
import jax
import jax.numpy as jnp
from jax.experimental import pallas as pl
from jax.experimental.pallas import tpu as pltpu


# -------------------------- model sizes --------------------------
B = 4          # number of sentences (batched inside one kernel call)
S = 8          # sentence length
E = 32         # embedding_dim
H = 32         # hidden_dim
V = 16         # vocab_size
T = 8          # tagset_size
TP = 128       # lane-padded tagset width


# -------------------------- Pallas kernel --------------------------
def make_lstm_tagger_kernel(bn):
    """Kernel closed over the batch size bn (bn sentences per invocation)."""
    SB = S * bn

    def kernel(tok_ref,                 # VMEM (SB, 1)  int32
               tab_ref,                 # VMEM (V, 4H)  bf16  (emb @ W_ih^T, g cols x2)
               whh_ref,                 # VMEM (H, 4H)  bf16  (g cols x2)
               b_ref,                   # VMEM (1, 4H)  f32   (g quarter x2)
               wtag_ref,                # VMEM (H, TP)  bf16
               btag_ref,                # VMEM (1, TP)  f32
               out_ref,                 # VMEM (SB, TP) f32
               hseq_ref):               # VMEM scratch (SB, H) f32
        # 1) One-hot over the vocab for all B*S tokens (replaces the gather loop).
        tok = tok_ref[...]                                         # (SB, 1) int32
        iota_v = jax.lax.broadcasted_iota(jnp.int32, (SB, V), 1)   # (SB, V)
        onehot = (iota_v == tok).astype(jnp.bfloat16)              # (SB, V)

        # 2) Hoisted input projection for every sentence and timestep at once:
        #    one (SB,V)@(V,4H) MXU op + bias, entirely off the serial path.
        xp = (jnp.dot(onehot, tab_ref[...],
                      preferred_element_type=jnp.float32)
              + b_ref[...])                                        # (SB, 4H) f32

        whh = whh_ref[...]                                         # (H, 4H) bf16

        # 3) Statically-unrolled recurrence over S steps, batched over bn sentences.
        #    Serial chain per step: MXU(h@Whh) -> VPU add -> EUP(sigmoid) -> VPU
        #    -> EUP(tanh c) -> VPU.  (tanh(gates) eliminated via the 2x g-gate trick.)
        h = jnp.zeros((bn, H), jnp.float32)
        c = jnp.zeros((bn, H), jnp.float32)
        for t in range(S):
            gates = xp[t * bn:(t + 1) * bn, :] + jnp.dot(
                h.astype(jnp.bfloat16), whh,
                preferred_element_type=jnp.float32)                # (bn, 4H) f32
            sig = jax.nn.sigmoid(gates)                            # single EUP pass
            i_g = sig[:, 0 * H:1 * H]
            f_g = sig[:, 1 * H:2 * H]
            g_g = 2.0 * sig[:, 2 * H:3 * H] - 1.0                  # tanh(x)=2*sigmoid(2x)-1
            o_g = sig[:, 3 * H:4 * H]
            c = f_g * c + i_g * g_g
            h = o_g * jnp.tanh(c)
            hseq_ref[pl.ds(t * bn, bn), :] = h                     # static sublane store

        # 4) Tag projection into the lane-dense (SB, 128) slab + log-softmax.
        #    Padded columns: weight 0, bias -1e30 -> exp underflows to 0 in f32,
        #    so the log-softmax only "sees" the real T columns.
        hseq = hseq_ref[...]                                       # (SB, H) f32
        tag = (jnp.dot(hseq.astype(jnp.bfloat16), wtag_ref[...],
                       preferred_element_type=jnp.float32)
               + btag_ref[...])                                    # (SB, TP) f32
        m = jnp.max(tag, axis=-1, keepdims=True)
        lse = jnp.log(jnp.sum(jnp.exp(tag - m), axis=-1, keepdims=True)) + m
        out_ref[...] = tag - lse

    return kernel


# -------------------------- wrapper --------------------------
def lstm_tagger(tokens, emb, w_ih, w_hh, b_ih, b_hh, w_tag, b_tag):
    # Accept a single sentence (S,) (module semantics) or a batch (B, S).
    single = tokens.ndim == 1
    tok2d = (tokens.reshape(1, -1) if single else tokens).astype(jnp.int32)
    bn, sn = tok2d.shape
    assert sn == S
    SB = sn * bn

    # Timestep-major flatten so each step's bn rows are contiguous: row = s*bn + b.
    tok_flat = tok2d.T.reshape(SB, 1)

    g = slice(2 * H, 3 * H)  # g-gate quarter in PyTorch [i|f|g|o] order

    # Fold embedding + input projection into a (V, 4H) table (glue, computed once);
    # pre-scale the g-gate columns by 2 so the kernel needs only one sigmoid pass.
    table = (emb.astype(jnp.float32) @ w_ih.T.astype(jnp.float32))          # (V, 4H)
    table = table.at[:, g].multiply(2.0).astype(jnp.bfloat16)
    whh_t = jnp.asarray(w_hh.T, jnp.float32).at[:, g].multiply(2.0) \
               .astype(jnp.bfloat16)                                        # (H, 4H)
    bias = (b_ih + b_hh).astype(jnp.float32).reshape(1, 4 * H) \
               .at[:, g].multiply(2.0)                                      # (1, 4H) f32
    wtag_pad = jnp.zeros((H, TP), jnp.float32).at[:, :T].set(
        jnp.asarray(w_tag.T, jnp.float32)).astype(jnp.bfloat16)             # (H, TP)
    btag_pad = jnp.full((1, TP), -1e30, jnp.float32).at[0, :T].set(
        b_tag.astype(jnp.float32))                                          # (1, TP) f32

    const2 = lambda i: (0, 0)   # everything is a single full-array VMEM block
    grid_spec = pltpu.PrefetchScalarGridSpec(
        num_scalar_prefetch=0,
        grid=(1,),              # single grid step: all sentences in one invocation
        in_specs=[
            pl.BlockSpec((SB, 1), const2),
            pl.BlockSpec((V, 4 * H), const2),
            pl.BlockSpec((H, 4 * H), const2),
            pl.BlockSpec((1, 4 * H), const2),
            pl.BlockSpec((H, TP), const2),
            pl.BlockSpec((1, TP), const2),
        ],
        out_specs=pl.BlockSpec((SB, TP), const2),
        scratch_shapes=[pltpu.VMEM((SB, H), jnp.float32)],
    )

    out_pad = pl.pallas_call(
        make_lstm_tagger_kernel(bn),
        out_shape=jax.ShapeDtypeStruct((SB, TP), jnp.float32),
        grid_spec=grid_spec,
        compiler_params=pltpu.CompilerParams(
            dimension_semantics=("arbitrary",)),
    )(tok_flat, table, whh_t, bias, wtag_pad, btag_pad)

    out = jnp.transpose(out_pad.reshape(sn, bn, TP)[:, :, :T], (1, 0, 2))   # (bn, S, T)
    return out[0] if single else out


# -------------------------- pure-JAX reference --------------------------
def lstm_tagger_ref(tokens, emb, w_ih, w_hh, b_ih, b_hh, w_tag, b_tag):
    x = emb[tokens]                                       # (S, E)

    def step(carry, xt):
        h, c = carry
        gates = xt @ w_ih.T + h @ w_hh.T + b_ih + b_hh    # (4H,)
        i_g, f_g, g_g, o_g = jnp.split(gates, 4)
        i_g = jax.nn.sigmoid(i_g)
        f_g = jax.nn.sigmoid(f_g)
        g_g = jnp.tanh(g_g)
        o_g = jax.nn.sigmoid(o_g)
        c_new = f_g * c + i_g * g_g
        h_new = o_g * jnp.tanh(c_new)
        return (h_new, c_new), h_new

    init = (jnp.zeros((H,), jnp.float32), jnp.zeros((H,), jnp.float32))
    _, hs = jax.lax.scan(step, init, x)                   # (S, H)
    tag = hs @ w_tag.T + b_tag
    return jax.nn.log_softmax(tag, axis=1)


# -------------------------- main --------------------------
if __name__ == "__main__":
    key = jax.random.PRNGKey(0)
    ks = jax.random.split(key, 8)

    scale = 1.0 / jnp.sqrt(H)
    emb = jax.random.normal(ks[0], (V, E), jnp.float32)
    w_ih = jax.random.uniform(ks[1], (4 * H, E), jnp.float32, -scale, scale)
    w_hh = jax.random.uniform(ks[2], (4 * H, H), jnp.float32, -scale, scale)
    b_ih = jax.random.uniform(ks[3], (4 * H,), jnp.float32, -scale, scale)
    b_hh = jax.random.uniform(ks[4], (4 * H,), jnp.float32, -scale, scale)
    w_tag = jax.random.uniform(ks[5], (T, H), jnp.float32, -scale, scale)
    b_tag = jax.random.uniform(ks[6], (T,), jnp.float32, -scale, scale)

    tokens = jax.random.randint(ks[7], (B, S), 0, V, jnp.int32)

    # bf16 MXU operands -> loosened tolerance vs the pure-f32 reference.
    ATOL, RTOL = 3e-2, 3e-2

    # Batched (all B sentences in a single kernel invocation).
    out = lstm_tagger(tokens, emb, w_ih, w_hh, b_ih, b_hh, w_tag, b_tag)
    out = jax.block_until_ready(out)
    ref = jax.vmap(lambda tk: lstm_tagger_ref(tk, emb, w_ih, w_hh, b_ih, b_hh,
                                              w_tag, b_tag))(tokens)
    assert out.shape == (B, S, T)
    assert jnp.allclose(out, ref, atol=ATOL, rtol=RTOL), "batched mismatch vs reference"

    # Single-sentence path (matches the PyTorch module's forward(sentence)).
    out1 = lstm_tagger(tokens[0], emb, w_ih, w_hh, b_ih, b_hh, w_tag, b_tag)
    out1 = jax.block_until_ready(out1)
    ref1 = lstm_tagger_ref(tokens[0], emb, w_ih, w_hh, b_ih, b_hh, w_tag, b_tag)
    assert out1.shape == (S, T)
    assert jnp.allclose(out1, ref1, atol=ATOL, rtol=RTOL), "single mismatch vs reference"

    print("KERNEL_OK")
</pallas_src>

<mosaic_0001>
module attributes {stable_mosaic.version = 11 : i64} {
  func.func @kernel(%arg0: i32, %arg1: memref<32x1xi32, #tpu.memory_space<vmem>>, %arg2: memref<16x128xbf16, #tpu.memory_space<vmem>>, %arg3: memref<32x128xbf16, #tpu.memory_space<vmem>>, %arg4: memref<1x128xf32, #tpu.memory_space<vmem>>, %arg5: memref<32x128xbf16, #tpu.memory_space<vmem>>, %arg6: memref<1x128xf32, #tpu.memory_space<vmem>>, %arg7: memref<32x128xf32, #tpu.memory_space<vmem>>, %arg8: memref<32x32xf32, #tpu.memory_space<vmem>>) attributes {dimension_semantics = [#tpu.dimension_semantics<arbitrary>], iteration_bounds = array<i64: 1>, scalar_prefetch = 0 : i64, scratch_operands = 1 : i64, tpu.core_type = #tpu.core_type<tc>, window_params = [{pipeline_mode = #tpu.pipeline_mode<synchronous>, transform_indices = @transform_0, window_bounds = array<i64: 32, 1>}, {pipeline_mode = #tpu.pipeline_mode<synchronous>, transform_indices = @transform_1, window_bounds = array<i64: 16, 128>}, {pipeline_mode = #tpu.pipeline_mode<synchronous>, transform_indices = @transform_2, window_bounds = array<i64: 32, 128>}, {pipeline_mode = #tpu.pipeline_mode<synchronous>, transform_indices = @transform_3, window_bounds = array<i64: 1, 128>}, {pipeline_mode = #tpu.pipeline_mode<synchronous>, transform_indices = @transform_4, window_bounds = array<i64: 32, 128>}, {pipeline_mode = #tpu.pipeline_mode<synchronous>, transform_indices = @transform_5, window_bounds = array<i64: 1, 128>}, {pipeline_mode = #tpu.pipeline_mode<synchronous>, transform_indices = @transform_6, window_bounds = array<i64: 32, 128>}]} {
    %c0 = arith.constant 0 : index
    %c0_0 = arith.constant 0 : index
    %0 = vector.load %arg1[%c0, %c0_0] : memref<32x1xi32, #tpu.memory_space<vmem>>, vector<32x1xi32>
    %1 = tpu.iota {dimensions = array<i32: 1>} : vector<32x16xi32>
    %2 = vector.broadcast %0 : vector<32x1xi32> to vector<32x16xi32>
    %3 = arith.cmpi eq, %1, %2 : vector<32x16xi32>
    %4 = arith.extui %3 : vector<32x16xi1> to vector<32x16xi32>
    %5 = arith.sitofp %4 : vector<32x16xi32> to vector<32x16xf32>
    %6 = arith.truncf %5 : vector<32x16xf32> to vector<32x16xbf16>
    %c0_1 = arith.constant 0 : index
    %c0_2 = arith.constant 0 : index
    %7 = vector.load %arg2[%c0_1, %c0_2] : memref<16x128xbf16, #tpu.memory_space<vmem>>, vector<16x128xbf16>
    %cst = arith.constant dense<0.000000e+00> : vector<32x128xf32>
    %8 = tpu.matmul %6, %7, %cst {dimension_numbers = #tpu.dot_dimension_numbers<[1], [0], [0], [1], [0, 0, 1, 1], [], []>} : vector<32x16xbf16>, vector<16x128xbf16>, vector<32x128xf32> -> vector<32x128xf32>
    %c0_3 = arith.constant 0 : index
    %c0_4 = arith.constant 0 : index
    %9 = vector.load %arg4[%c0_3, %c0_4] : memref<1x128xf32, #tpu.memory_space<vmem>>, vector<1x128xf32>
    %10 = vector.broadcast %9 : vector<1x128xf32> to vector<32x128xf32>
    %11 = arith.addf %8, %10 : vector<32x128xf32>
    %c0_5 = arith.constant 0 : index
    %c0_6 = arith.constant 0 : index
    %12 = vector.load %arg3[%c0_5, %c0_6] : memref<32x128xbf16, #tpu.memory_space<vmem>>, vector<32x128xbf16>
    %cst_7 = arith.constant 0.000000e+00 : f32
    %13 = vector.broadcast %cst_7 : f32 to vector<4x32xf32>
    %cst_8 = arith.constant 0.000000e+00 : f32
    %14 = vector.broadcast %cst_8 : f32 to vector<4x32xf32>
    %15 = vector.extract_strided_slice %11 {offsets = [0, 0], sizes = [4, 128], strides = [1, 1]} : vector<32x128xf32> to vector<4x128xf32>
    %16 = arith.truncf %13 : vector<4x32xf32> to vector<4x32xbf16>
    %cst_9 = arith.constant dense<0.000000e+00> : vector<4x128xf32>
    %17 = tpu.matmul %16, %12, %cst_9 {dimension_numbers = #tpu.dot_dimension_numbers<[1], [0], [0], [1], [0, 0, 1, 1], [], []>} : vector<4x32xbf16>, vector<32x128xbf16>, vector<4x128xf32> -> vector<4x128xf32>
    %18 = arith.addf %15, %17 : vector<4x128xf32>
    %19 = arith.negf %18 : vector<4x128xf32>
    %20 = math.exp %19 : vector<4x128xf32>
    %cst_10 = arith.constant 1.000000e+00 : f32
    %21 = vector.broadcast %cst_10 : f32 to vector<4x128xf32>
    %22 = arith.addf %21, %20 : vector<4x128xf32>
    %23 = arith.divf %21, %22 : vector<4x128xf32>
    %24 = vector.extract_strided_slice %23 {offsets = [0, 0], sizes = [4, 32], strides = [1, 1]} : vector<4x128xf32> to vector<4x32xf32>
    %25 = vector.extract_strided_slice %23 {offsets = [0, 32], sizes = [4, 32], strides = [1, 1]} : vector<4x128xf32> to vector<4x32xf32>
    %26 = vector.extract_strided_slice %23 {offsets = [0, 64], sizes = [4, 32], strides = [1, 1]} : vector<4x128xf32> to vector<4x32xf32>
    %cst_11 = arith.constant 2.000000e+00 : f32
    %27 = vector.broadcast %cst_11 : f32 to vector<4x32xf32>
    %28 = arith.mulf %27, %26 : vector<4x32xf32>
    %cst_12 = arith.constant 1.000000e+00 : f32
    %29 = vector.broadcast %cst_12 : f32 to vector<4x32xf32>
    %30 = arith.subf %28, %29 : vector<4x32xf32>
    %31 = vector.extract_strided_slice %23 {offsets = [0, 96], sizes = [4, 32], strides = [1, 1]} : vector<4x128xf32> to vector<4x32xf32>
    %32 = arith.mulf %25, %14 : vector<4x32xf32>
    %33 = arith.mulf %24, %30 : vector<4x32xf32>
    %34 = arith.addf %32, %33 : vector<4x32xf32>
    %35 = math.tanh %34 : vector<4x32xf32>
    %36 = arith.mulf %31, %35 : vector<4x32xf32>
    %c0_13 = arith.constant 0 : index
    %c0_14 = arith.constant 0 : index
    %37 = vector.load %arg8[%c0_13, %c0_14] : memref<32x32xf32, #tpu.memory_space<vmem>>, vector<4x32xf32>
    tpu.vector_store %arg8[%c0_13, %c0_14], %36 {strides = array<i32>} : memref<32x32xf32, #tpu.memory_space<vmem>>, vector<4x32xf32>,
    %38 = vector.extract_strided_slice %11 {offsets = [4, 0], sizes = [4, 128], strides = [1, 1]} : vector<32x128xf32> to vector<4x128xf32>
    %39 = arith.truncf %36 : vector<4x32xf32> to vector<4x32xbf16>
    %cst_15 = arith.constant dense<0.000000e+00> : vector<4x128xf32>
    %40 = tpu.matmul %39, %12, %cst_15 {dimension_numbers = #tpu.dot_dimension_numbers<[1], [0], [0], [1], [0, 0, 1, 1], [], []>} : vector<4x32xbf16>, vector<32x128xbf16>, vector<4x128xf32> -> vector<4x128xf32>
    %41 = arith.addf %38, %40 : vector<4x128xf32>
    %42 = arith.negf %41 : vector<4x128xf32>
    %43 = math.exp %42 : vector<4x128xf32>
    %cst_16 = arith.constant 1.000000e+00 : f32
    %44 = vector.broadcast %cst_16 : f32 to vector<4x128xf32>
    %45 = arith.addf %44, %43 : vector<4x128xf32>
    %46 = arith.divf %44, %45 : vector<4x128xf32>
    %47 = vector.extract_strided_slice %46 {offsets = [0, 0], sizes = [4, 32], strides = [1, 1]} : vector<4x128xf32> to vector<4x32xf32>
    %48 = vector.extract_strided_slice %46 {offsets = [0, 32], sizes = [4, 32], strides = [1, 1]} : vector<4x128xf32> to vector<4x32xf32>
    %49 = vector.extract_strided_slice %46 {offsets = [0, 64], sizes = [4, 32], strides = [1, 1]} : vector<4x128xf32> to vector<4x32xf32>
    %cst_17 = arith.constant 2.000000e+00 : f32
    %50 = vector.broadcast %cst_17 : f32 to vector<4x32xf32>
    %51 = arith.mulf %50, %49 : vector<4x32xf32>
    %cst_18 = arith.constant 1.000000e+00 : f32
    %52 = vector.broadcast %cst_18 : f32 to vector<4x32xf32>
    %53 = arith.subf %51, %52 : vector<4x32xf32>
    %54 = vector.extract_strided_slice %46 {offsets = [0, 96], sizes = [4, 32], strides = [1, 1]} : vector<4x128xf32> to vector<4x32xf32>
    %55 = arith.mulf %48, %34 : vector<4x32xf32>
    %56 = arith.mulf %47, %53 : vector<4x32xf32>
    %57 = arith.addf %55, %56 : vector<4x32xf32>
    %58 = math.tanh %57 : vector<4x32xf32>
    %59 = arith.mulf %54, %58 : vector<4x32xf32>
    %c4 = arith.constant 4 : index
    %c0_19 = arith.constant 0 : index
    %60 = vector.load %arg8[%c4, %c0_19] : memref<32x32xf32, #tpu.memory_space<vmem>>, vector<4x32xf32>
    tpu.vector_store %arg8[%c4, %c0_19], %59 {strides = array<i32>} : memref<32x32xf32, #tpu.memory_space<vmem>>, vector<4x32xf32>,
    %61 = vector.extract_strided_slice %11 {offsets = [8, 0], sizes = [4, 128], strides = [1, 1]} : vector<32x128xf32> to vector<4x128xf32>
    %62 = arith.truncf %59 : vector<4x32xf32> to vector<4x32xbf16>
    %cst_20 = arith.constant dense<0.000000e+00> : vector<4x128xf32>
    %63 = tpu.matmul %62, %12, %cst_20 {dimension_numbers = #tpu.dot_dimension_numbers<[1], [0], [0], [1], [0, 0, 1, 1], [], []>} : vector<4x32xbf16>, vector<32x128xbf16>, vector<4x128xf32> -> vector<4x128xf32>
    %64 = arith.addf %61, %63 : vector<4x128xf32>
    %65 = arith.negf %64 : vector<4x128xf32>
    %66 = math.exp %65 : vector<4x128xf32>
    %cst_21 = arith.constant 1.000000e+00 : f32
    %67 = vector.broadcast %cst_21 : f32 to vector<4x128xf32>
    %68 = arith.addf %67, %66 : vector<4x128xf32>
    %69 = arith.divf %67, %68 : vector<4x128xf32>
    %70 = vector.extract_strided_slice %69 {offsets = [0, 0], sizes = [4, 32], strides = [1, 1]} : vector<4x128xf32> to vector<4x32xf32>
    %71 = vector.extract_strided_slice %69 {offsets = [0, 32], sizes = [4, 32], strides = [1, 1]} : vector<4x128xf32> to vector<4x32xf32>
    %72 = vector.extract_strided_slice %69 {offsets = [0, 64], sizes = [4, 32], strides = [1, 1]} : vector<4x128xf32> to vector<4x32xf32>
    %cst_22 = arith.constant 2.000000e+00 : f32
    %73 = vector.broadcast %cst_22 : f32 to vector<4x32xf32>
    %74 = arith.mulf %73, %72 : vector<4x32xf32>
    %cst_23 = arith.constant 1.000000e+00 : f32
    %75 = vector.broadcast %cst_23 : f32 to vector<4x32xf32>
    %76 = arith.subf %74, %75 : vector<4x32xf32>
    %77 = vector.extract_strided_slice %69 {offsets = [0, 96], sizes = [4, 32], strides = [1, 1]} : vector<4x128xf32> to vector<4x32xf32>
    %78 = arith.mulf %71, %57 : vector<4x32xf32>
    %79 = arith.mulf %70, %76 : vector<4x32xf32>
    %80 = arith.addf %78, %79 : vector<4x32xf32>
    %81 = math.tanh %80 : vector<4x32xf32>
    %82 = arith.mulf %77, %81 : vector<4x32xf32>
    %c8 = arith.constant 8 : index
    %c0_24 = arith.constant 0 : index
    %83 = vector.load %arg8[%c8, %c0_24] : memref<32x32xf32, #tpu.memory_space<vmem>>, vector<4x32xf32>
    tpu.vector_store %arg8[%c8, %c0_24], %82 {strides = array<i32>} : memref<32x32xf32, #tpu.memory_space<vmem>>, vector<4x32xf32>,
    %84 = vector.extract_strided_slice %11 {offsets = [12, 0], sizes = [4, 128], strides = [1, 1]} : vector<32x128xf32> to vector<4x128xf32>
    %85 = arith.truncf %82 : vector<4x32xf32> to vector<4x32xbf16>
    %cst_25 = arith.constant dense<0.000000e+00> : vector<4x128xf32>
    %86 = tpu.matmul %85, %12, %cst_25 {dimension_numbers = #tpu.dot_dimension_numbers<[1], [0], [0], [1], [0, 0, 1, 1], [], []>} : vector<4x32xbf16>, vector<32x128xbf16>, vector<4x128xf32> -> vector<4x128xf32>
    %87 = arith.addf %84, %86 : vector<4x128xf32>
    %88 = arith.negf %87 : vector<4x128xf32>
    %89 = math.exp %88 : vector<4x128xf32>
    %cst_26 = arith.constant 1.000000e+00 : f32
    %90 = vector.broadcast %cst_26 : f32 to vector<4x128xf32>
    %91 = arith.addf %90, %89 : vector<4x128xf32>
    %92 = arith.divf %90, %91 : vector<4x128xf32>
    %93 = vector.extract_strided_slice %92 {offsets = [0, 0], sizes = [4, 32], strides = [1, 1]} : vector<4x128xf32> to vector<4x32xf32>
    %94 = vector.extract_strided_slice %92 {offsets = [0, 32], sizes = [4, 32], strides = [1, 1]} : vector<4x128xf32> to vector<4x32xf32>
    %95 = vector.extract_strided_slice %92 {offsets = [0, 64], sizes = [4, 32], strides = [1, 1]} : vector<4x128xf32> to vector<4x32xf32>
    %cst_27 = arith.constant 2.000000e+00 : f32
    %96 = vector.broadcast %cst_27 : f32 to vector<4x32xf32>
    %97 = arith.mulf %96, %95 : vector<4x32xf32>
    %cst_28 = arith.constant 1.000000e+00 : f32
    %98 = vector.broadcast %cst_28 : f32 to vector<4x32xf32>
    %99 = arith.subf %97, %98 : vector<4x32xf32>
    %100 = vector.extract_strided_slice %92 {offsets = [0, 96], sizes = [4, 32], strides = [1, 1]} : vector<4x128xf32> to vector<4x32xf32>
    %101 = arith.mulf %94, %80 : vector<4x32xf32>
    %102 = arith.mulf %93, %99 : vector<4x32xf32>
    %103 = arith.addf %101, %102 : vector<4x32xf32>
    %104 = math.tanh %103 : vector<4x32xf32>
    %105 = arith.mulf %100, %104 : vector<4x32xf32>
    %c12 = arith.constant 12 : index
    %c0_29 = arith.constant 0 : index
    %106 = vector.load %arg8[%c12, %c0_29] : memref<32x32xf32, #tpu.memory_space<vmem>>, vector<4x32xf32>
    tpu.vector_store %arg8[%c12, %c0_29], %105 {strides = array<i32>} : memref<32x32xf32, #tpu.memory_space<vmem>>, vector<4x32xf32>,
    %107 = vector.extract_strided_slice %11 {offsets = [16, 0], sizes = [4, 128], strides = [1, 1]} : vector<32x128xf32> to vector<4x128xf32>
    %108 = arith.truncf %105 : vector<4x32xf32> to vector<4x32xbf16>
    %cst_30 = arith.constant dense<0.000000e+00> : vector<4x128xf32>
    %109 = tpu.matmul %108, %12, %cst_30 {dimension_numbers = #tpu.dot_dimension_numbers<[1], [0], [0], [1], [0, 0, 1, 1], [], []>} : vector<4x32xbf16>, vector<32x128xbf16>, vector<4x128xf32> -> vector<4x128xf32>
    %110 = arith.addf %107, %109 : vector<4x128xf32>
    %111 = arith.negf %110 : vector<4x128xf32>
    %112 = math.exp %111 : vector<4x128xf32>
    %cst_31 = arith.constant 1.000000e+00 : f32
    %113 = vector.broadcast %cst_31 : f32 to vector<4x128xf32>
    %114 = arith.addf %113, %112 : vector<4x128xf32>
    %115 = arith.divf %113, %114 : vector<4x128xf32>
    %116 = vector.extract_strided_slice %115 {offsets = [0, 0], sizes = [4, 32], strides = [1, 1]} : vector<4x128xf32> to vector<4x32xf32>
    %117 = vector.extract_strided_slice %115 {offsets = [0, 32], sizes = [4, 32], strides = [1, 1]} : vector<4x128xf32> to vector<4x32xf32>
    %118 = vector.extract_strided_slice %115 {offsets = [0, 64], sizes = [4, 32], strides = [1, 1]} : vector<4x128xf32> to vector<4x32xf32>
    %cst_32 = arith.constant 2.000000e+00 : f32
    %119 = vector.broadcast %cst_32 : f32 to vector<4x32xf32>
    %120 = arith.mulf %119, %118 : vector<4x32xf32>
    %cst_33 = arith.constant 1.000000e+00 : f32
    %121 = vector.broadcast %cst_33 : f32 to vector<4x32xf32>
    %122 = arith.subf %120, %121 : vector<4x32xf32>
    %123 = vector.extract_strided_slice %115 {offsets = [0, 96], sizes = [4, 32], strides = [1, 1]} : vector<4x128xf32> to vector<4x32xf32>
    %124 = arith.mulf %117, %103 : vector<4x32xf32>
    %125 = arith.mulf %116, %122 : vector<4x32xf32>
    %126 = arith.addf %124, %125 : vector<4x32xf32>
    %127 = math.tanh %126 : vector<4x32xf32>
    %128 = arith.mulf %123, %127 : vector<4x32xf32>
    %c16 = arith.constant 16 : index
    %c0_34 = arith.constant 0 : index
    %129 = vector.load %arg8[%c16, %c0_34] : memref<32x32xf32, #tpu.memory_space<vmem>>, vector<4x32xf32>
    tpu.vector_store %arg8[%c16, %c0_34], %128 {strides = array<i32>} : memref<32x32xf32, #tpu.memory_space<vmem>>, vector<4x32xf32>,
    %130 = vector.extract_strided_slice %11 {offsets = [20, 0], sizes = [4, 128], strides = [1, 1]} : vector<32x128xf32> to vector<4x128xf32>
    %131 = arith.truncf %128 : vector<4x32xf32> to vector<4x32xbf16>
    %cst_35 = arith.constant dense<0.000000e+00> : vector<4x128xf32>
    %132 = tpu.matmul %131, %12, %cst_35 {dimension_numbers = #tpu.dot_dimension_numbers<[1], [0], [0], [1], [0, 0, 1, 1], [], []>} : vector<4x32xbf16>, vector<32x128xbf16>, vector<4x128xf32> -> vector<4x128xf32>
    %133 = arith.addf %130, %132 : vector<4x128xf32>
    %134 = arith.negf %133 : vector<4x128xf32>
    %135 = math.exp %134 : vector<4x128xf32>
    %cst_36 = arith.constant 1.000000e+00 : f32
    %136 = vector.broadcast %cst_36 : f32 to vector<4x128xf32>
    %137 = arith.addf %136, %135 : vector<4x128xf32>
    %138 = arith.divf %136, %137 : vector<4x128xf32>
    %139 = vector.extract_strided_slice %138 {offsets = [0, 0], sizes = [4, 32], strides = [1, 1]} : vector<4x128xf32> to vector<4x32xf32>
    %140 = vector.extract_strided_slice %138 {offsets = [0, 32], sizes = [4, 32], strides = [1, 1]} : vector<4x128xf32> to vector<4x32xf32>
    %141 = vector.extract_strided_slice %138 {offsets = [0, 64], sizes = [4, 32], strides = [1, 1]} : vector<4x128xf32> to vector<4x32xf32>
    %cst_37 = arith.constant 2.000000e+00 : f32
    %142 = vector.broadcast %cst_37 : f32 to vector<4x32xf32>
    %143 = arith.mulf %142, %141 : vector<4x32xf32>
    %cst_38 = arith.constant 1.000000e+00 : f32
    %144 = vector.broadcast %cst_38 : f32 to vector<4x32xf32>
    %145 = arith.subf %143, %144 : vector<4x32xf32>
    %146 = vector.extract_strided_slice %138 {offsets = [0, 96], sizes = [4, 32], strides = [1, 1]} : vector<4x128xf32> to vector<4x32xf32>
    %147 = arith.mulf %140, %126 : vector<4x32xf32>
    %148 = arith.mulf %139, %145 : vector<4x32xf32>
    %149 = arith.addf %147, %148 : vector<4x32xf32>
    %150 = math.tanh %149 : vector<4x32xf32>
    %151 = arith.mulf %146, %150 : vector<4x32xf32>
    %c20 = arith.constant 20 : index
    %c0_39 = arith.constant 0 : index
    %152 = vector.load %arg8[%c20, %c0_39] : memref<32x32xf32, #tpu.memory_space<vmem>>, vector<4x32xf32>
    tpu.vector_store %arg8[%c20, %c0_39], %151 {strides = array<i32>} : memref<32x32xf32, #tpu.memory_space<vmem>>, vector<4x32xf32>,
    %153 = vector.extract_strided_slice %11 {offsets = [24, 0], sizes = [4, 128], strides = [1, 1]} : vector<32x128xf32> to vector<4x128xf32>
    %154 = arith.truncf %151 : vector<4x32xf32> to vector<4x32xbf16>
    %cst_40 = arith.constant dense<0.000000e+00> : vector<4x128xf32>
    %155 = tpu.matmul %154, %12, %cst_40 {dimension_numbers = #tpu.dot_dimension_numbers<[1], [0], [0], [1], [0, 0, 1, 1], [], []>} : vector<4x32xbf16>, vector<32x128xbf16>, vector<4x128xf32> -> vector<4x128xf32>
    %156 = arith.addf %153, %155 : vector<4x128xf32>
    %157 = arith.negf %156 : vector<4x128xf32>
    %158 = math.exp %157 : vector<4x128xf32>
    %cst_41 = arith.constant 1.000000e+00 : f32
    %159 = vector.broadcast %cst_41 : f32 to vector<4x128xf32>
    %160 = arith.addf %159, %158 : vector<4x128xf32>
    %161 = arith.divf %159, %160 : vector<4x128xf32>
    %162 = vector.extract_strided_slice %161 {offsets = [0, 0], sizes = [4, 32], strides = [1, 1]} : vector<4x128xf32> to vector<4x32xf32>
    %163 = vector.extract_strided_slice %161 {offsets = [0, 32], sizes = [4, 32], strides = [1, 1]} : vector<4x128xf32> to vector<4x32xf32>
    %164 = vector.extract_strided_slice %161 {offsets = [0, 64], sizes = [4, 32], strides = [1, 1]} : vector<4x128xf32> to vector<4x32xf32>
    %cst_42 = arith.constant 2.000000e+00 : f32
    %165 = vector.broadcast %cst_42 : f32 to vector<4x32xf32>
    %166 = arith.mulf %165, %164 : vector<4x32xf32>
    %cst_43 = arith.constant 1.000000e+00 : f32
    %167 = vector.broadcast %cst_43 : f32 to vector<4x32xf32>
    %168 = arith.subf %166, %167 : vector<4x32xf32>
    %169 = vector.extract_strided_slice %161 {offsets = [0, 96], sizes = [4, 32], strides = [1, 1]} : vector<4x128xf32> to vector<4x32xf32>
    %170 = arith.mulf %163, %149 : vector<4x32xf32>
    %171 = arith.mulf %162, %168 : vector<4x32xf32>
    %172 = arith.addf %170, %171 : vector<4x32xf32>
    %173 = math.tanh %172 : vector<4x32xf32>
    %174 = arith.mulf %169, %173 : vector<4x32xf32>
    %c24 = arith.constant 24 : index
    %c0_44 = arith.constant 0 : index
    %175 = vector.load %arg8[%c24, %c0_44] : memref<32x32xf32, #tpu.memory_space<vmem>>, vector<4x32xf32>
    tpu.vector_store %arg8[%c24, %c0_44], %174 {strides = array<i32>} : memref<32x32xf32, #tpu.memory_space<vmem>>, vector<4x32xf32>,
    %176 = vector.extract_strided_slice %11 {offsets = [28, 0], sizes = [4, 128], strides = [1, 1]} : vector<32x128xf32> to vector<4x128xf32>
    %177 = arith.truncf %174 : vector<4x32xf32> to vector<4x32xbf16>
    %cst_45 = arith.constant dense<0.000000e+00> : vector<4x128xf32>
    %178 = tpu.matmul %177, %12, %cst_45 {dimension_numbers = #tpu.dot_dimension_numbers<[1], [0], [0], [1], [0, 0, 1, 1], [], []>} : vector<4x32xbf16>, vector<32x128xbf16>, vector<4x128xf32> -> vector<4x128xf32>
    %179 = arith.addf %176, %178 : vector<4x128xf32>
    %180 = arith.negf %179 : vector<4x128xf32>
    %181 = math.exp %180 : vector<4x128xf32>
    %cst_46 = arith.constant 1.000000e+00 : f32
    %182 = vector.broadcast %cst_46 : f32 to vector<4x128xf32>
    %183 = arith.addf %182, %181 : vector<4x128xf32>
    %184 = arith.divf %182, %183 : vector<4x128xf32>
    %185 = vector.extract_strided_slice %184 {offsets = [0, 0], sizes = [4, 32], strides = [1, 1]} : vector<4x128xf32> to vector<4x32xf32>
    %186 = vector.extract_strided_slice %184 {offsets = [0, 32], sizes = [4, 32], strides = [1, 1]} : vector<4x128xf32> to vector<4x32xf32>
    %187 = vector.extract_strided_slice %184 {offsets = [0, 64], sizes = [4, 32], strides = [1, 1]} : vector<4x128xf32> to vector<4x32xf32>
    %cst_47 = arith.constant 2.000000e+00 : f32
    %188 = vector.broadcast %cst_47 : f32 to vector<4x32xf32>
    %189 = arith.mulf %188, %187 : vector<4x32xf32>
    %cst_48 = arith.constant 1.000000e+00 : f32
    %190 = vector.broadcast %cst_48 : f32 to vector<4x32xf32>
    %191 = arith.subf %189, %190 : vector<4x32xf32>
    %192 = vector.extract_strided_slice %184 {offsets = [0, 96], sizes = [4, 32], strides = [1, 1]} : vector<4x128xf32> to vector<4x32xf32>
    %193 = arith.mulf %186, %172 : vector<4x32xf32>
    %194 = arith.mulf %185, %191 : vector<4x32xf32>
    %195 = arith.addf %193, %194 : vector<4x32xf32>
    %196 = math.tanh %195 : vector<4x32xf32>
    %197 = arith.mulf %192, %196 : vector<4x32xf32>
    %c28 = arith.constant 28 : index
    %c0_49 = arith.constant 0 : index
    %198 = vector.load %arg8[%c28, %c0_49] : memref<32x32xf32, #tpu.memory_space<vmem>>, vector<4x32xf32>
    tpu.vector_store %arg8[%c28, %c0_49], %197 {strides = array<i32>} : memref<32x32xf32, #tpu.memory_space<vmem>>, vector<4x32xf32>,
    %c0_50 = arith.constant 0 : index
    %c0_51 = arith.constant 0 : index
    %199 = vector.load %arg8[%c0_50, %c0_51] : memref<32x32xf32, #tpu.memory_space<vmem>>, vector<32x32xf32>
    %200 = arith.truncf %199 : vector<32x32xf32> to vector<32x32xbf16>
    %c0_52 = arith.constant 0 : index
    %c0_53 = arith.constant 0 : index
    %201 = vector.load %arg5[%c0_52, %c0_53] : memref<32x128xbf16, #tpu.memory_space<vmem>>, vector<32x128xbf16>
    %cst_54 = arith.constant dense<0.000000e+00> : vector<32x128xf32>
    %202 = tpu.matmul %200, %201, %cst_54 {dimension_numbers = #tpu.dot_dimension_numbers<[1], [0], [0], [1], [0, 0, 1, 1], [], []>} : vector<32x32xbf16>, vector<32x128xbf16>, vector<32x128xf32> -> vector<32x128xf32>
    %c0_55 = arith.constant 0 : index
    %c0_56 = arith.constant 0 : index
    %203 = vector.load %arg6[%c0_55, %c0_56] : memref<1x128xf32, #tpu.memory_space<vmem>>, vector<1x128xf32>
    %204 = vector.broadcast %203 : vector<1x128xf32> to vector<32x128xf32>
    %205 = arith.addf %202, %204 : vector<32x128xf32>
    %cst_57 = arith.constant dense<0xFF800000> : vector<32xf32>
    %206 = vector.multi_reduction <maximumf>, %205, %cst_57 [1] : vector<32x128xf32> to vector<32xf32>
    %207 = vector.shape_cast %206 : vector<32xf32> to vector<32x1xf32>
    %208 = vector.broadcast %207 : vector<32x1xf32> to vector<32x128xf32>
    %209 = arith.subf %205, %208 : vector<32x128xf32>
    %210 = math.exp %209 : vector<32x128xf32>
    %cst_58 = arith.constant dense<0.000000e+00> : vector<32xf32>
    %211 = vector.multi_reduction <add>, %210, %cst_58 [1] : vector<32x128xf32> to vector<32xf32>
    %212 = vector.shape_cast %211 : vector<32xf32> to vector<32x1xf32>
    %213 = math.log %212 : vector<32x1xf32>
    %214 = arith.addf %213, %207 : vector<32x1xf32>
    %215 = vector.broadcast %214 : vector<32x1xf32> to vector<32x128xf32>
    %216 = arith.subf %205, %215 : vector<32x128xf32>
    %c0_59 = arith.constant 0 : index
    %c0_60 = arith.constant 0 : index
    %217 = vector.load %arg7[%c0_59, %c0_60] : memref<32x128xf32, #tpu.memory_space<vmem>>, vector<32x128xf32>
    tpu.vector_store %arg7[%c0_59, %c0_60], %216 {strides = array<i32>} : memref<32x128xf32, #tpu.memory_space<vmem>>, vector<32x128xf32>,
    return
  }
  func.func @transform_0(%arg0: i32) -> (i32, i32) {
    %c0_i32 = arith.constant 0 : i32
    %c0_i32_0 = arith.constant 0 : i32
    %c0_i32_1 = arith.constant 0 : i32
    return %c0_i32, %c0_i32_0 : i32, i32
  }
  func.func @transform_1(%arg0: i32) -> (i32, i32) {
    %c0_i32 = arith.constant 0 : i32
    %c0_i32_0 = arith.constant 0 : i32
    %c0_i32_1 = arith.constant 0 : i32
    return %c0_i32, %c0_i32_0 : i32, i32
  }
  func.func @transform_2(%arg0: i32) -> (i32, i32) {
    %c0_i32 = arith.constant 0 : i32
    %c0_i32_0 = arith.constant 0 : i32
    %c0_i32_1 = arith.constant 0 : i32
    return %c0_i32, %c0_i32_0 : i32, i32
  }
  func.func @transform_3(%arg0: i32) -> (i32, i32) {
    %c0_i32 = arith.constant 0 : i32
    %c0_i32_0 = arith.constant 0 : i32
    %c0_i32_1 = arith.constant 0 : i32
    return %c0_i32, %c0_i32_0 : i32, i32
  }
  func.func @transform_4(%arg0: i32) -> (i32, i32) {
    %c0_i32 = arith.constant 0 : i32
    %c0_i32_0 = arith.constant 0 : i32
    %c0_i32_1 = arith.constant 0 : i32
    return %c0_i32, %c0_i32_0 : i32, i32
  }
  func.func @transform_5(%arg0: i32) -> (i32, i32) {
    %c0_i32 = arith.constant 0 : i32
    %c0_i32_0 = arith.constant 0 : i32
    %c0_i32_1 = arith.constant 0 : i32
    return %c0_i32, %c0_i32_0 : i32, i32
  }
  func.func @transform_6(%arg0: i32) -> (i32, i32) {
    %c0_i32 = arith.constant 0 : i32
    %c0_i32_0 = arith.constant 0 : i32
    %c0_i32_1 = arith.constant 0 : i32
    return %c0_i32, %c0_i32_0 : i32, i32
  }
}

</mosaic_0001>

<llo_original>
// kernel: tpu_custom_call.1
$region0: #{tpu_custom_call.1}
  #allocation0 [shape = 'u32[]', space=smem, size = 0x4, offset = 0x4, fixed_abs, tag = 'smem constant byte address 0x4 - core index']
  #allocation1 [shape = 'u32[144,128]{1,0:T(1,128)}', space=vmem, size = 0x12000, scoped, tag = 'internal scratch']
  #allocation2 [shape = 'f32[32,32]{1,0:T(8,128)}', space=vmem, size = 0x4000, scoped, tag = 'scratch operand']
  %s0 = inlined_call_operand.vmem [shape: s32[32,1], index: 0, kind: input, shape index: {}]
  %s1 = inlined_call_operand.hbm [shape: bf16[16,128], index: 1, kind: input, shape index: {}]
  %s2 = inlined_call_operand.vmem [shape: bf16[32,128], index: 2, kind: input, shape index: {}]
  %s3 = inlined_call_operand.vmem [shape: f32[1,128], index: 3, kind: input, shape index: {}]
  %s4 = inlined_call_operand.vmem [shape: bf16[32,128], index: 4, kind: input, shape index: {}]
  %s5 = inlined_call_operand.vmem [shape: f32[1,128], index: 5, kind: input, shape index: {}]
  %s6 = inlined_call_operand.hbm [shape: f32[32,128], index: 6, kind: output, shape index: {}]
  %s7 = sld [smem:[#allocation0]]
  $region38: #{tpu_custom_call.1} parent=0
    _
  %s9 = ssub.s32 1, %s7
  %s10 = scalar_select 0, %s9, %s7
  $region1: #{tpu_custom_call.1} parent=0
    #allocation3 [shape = 'u8[4096]{0}', space=vmem, size = 0x1000, scoped, tag = 'input window, operand 1, single buffered']
    #allocation4 [shape = 's32[1]{0}', space=sflag, size = 0x4, scoped, tag = 'scoped memory for tpu_custom_call.1']
    #allocation5 [shape = 's32[1]{0}', space=sflag, size = 0x4, scoped, tag = 'scoped memory for tpu_custom_call.1']
    #allocation6 [shape = 'u8[16384]{0}', space=vmem, size = 0x4000, scoped, tag = 'output window, operand 0, single buffered']
    %11 = vsyncpa [#allocation4], 0
    %12 = vsyncpa [#allocation5], 0
    // Predicated region
    $region2: #{tpu_custom_call.1} parent=1 // pred_check
      _
    $region3: #{tpu_custom_call.1} parent=1 // pred_check_branch
      %14 = sbr.rel (0) target = $region5
    $region4: #{tpu_custom_call.1} parent=1 // pred_region
      _
    $region5: #{tpu_custom_call.1} parent=1 // pred_fallthru
      _
    // Predicated region
    $region6: #{tpu_custom_call.1} parent=1 // pred_check
      _
    $region7: #{tpu_custom_call.1} parent=1 // pred_check_branch
      %16 = sbr.rel (0) target = $region9
    $region8: #{tpu_custom_call.1} parent=1 // pred_region
      %s18 = ssub.s32 128, 128
      %19 = vsyncadd [#allocation4], %s18
      %s20 = sshll.u32 [#allocation3], 4
      %s21 = int_to_ptr.vmem [resolvable:$true] %s20
      %26 = dma.hbm_to_vmem [thread:$0]  %s1, 128, %s21, [#allocation4], 64, 64, 4
    $region9: #{tpu_custom_call.1} parent=1 // pred_fallthru
      _
    // Predicated region
    $region10: #{tpu_custom_call.1} parent=1 // pred_check
      _
    $region11: #{tpu_custom_call.1} parent=1 // pred_check_branch
      %28 = sbr.rel (0) target = $region13
    $region12: #{tpu_custom_call.1} parent=1 // pred_region
      _
    $region13: #{tpu_custom_call.1} parent=1 // pred_fallthru
      _
    // Predicated region
    $region14: #{tpu_custom_call.1} parent=1 // pred_check
      _
    $region15: #{tpu_custom_call.1} parent=1 // pred_check_branch
      %30 = sbr.rel (0) target = $region17
    $region16: #{tpu_custom_call.1} parent=1 // pred_region
      _
    $region17: #{tpu_custom_call.1} parent=1 // pred_fallthru
      _
    // Predicated region
    $region18: #{tpu_custom_call.1} parent=1 // pred_check
      _
    $region19: #{tpu_custom_call.1} parent=1 // pred_check_branch
      %32 = sbr.rel (0) target = $region21
    $region20: #{tpu_custom_call.1} parent=1 // pred_region
      _
    $region21: #{tpu_custom_call.1} parent=1 // pred_fallthru
      _
    // Predicated region
    $region22: #{tpu_custom_call.1} parent=1 // pred_check
      _
    $region23: #{tpu_custom_call.1} parent=1 // pred_check_branch
      %34 = sbr.rel (0) target = $region25
    $region24: #{tpu_custom_call.1} parent=1 // pred_region
      _
    $region25: #{tpu_custom_call.1} parent=1 // pred_fallthru
      _
    // Predicated region
    $region26: #{tpu_custom_call.1} parent=1 // pred_check
      _
    $region27: #{tpu_custom_call.1} parent=1 // pred_check_branch
      %36 = sbr.rel (0) target = $region29
    $region28: #{tpu_custom_call.1} parent=1 // pred_region
      %37 = dma.done [#allocation4], 128
    $region29: #{tpu_custom_call.1} parent=1 // pred_fallthru
      _
    %v39 = vld [vmem:[%s0] sm:$0xff]
    %v40 = vld [vmem:[%s0 + $0x8] sm:$0xff]
    %v41 = vld [vmem:[%s0 + $0x10] sm:$0xff]
    %v42 = vld [vmem:[%s0 + $0x18] sm:$0xff]
    %v43 = vlaneseq
    %v44 = vand.u32 %v43, 127
    %45 = vset.pattern.permute.xlu0 0
    %46 = vperm.xlu0 %45, %v39
    %v47 = vpop.permute.xlu0 %46
    %48 = vset.pattern.permute.xlu0 0
    %49 = vperm.xlu0 %48, %v40
    %v50 = vpop.permute.xlu0 %49
    %51 = vset.pattern.permute.xlu0 0
    %52 = vperm.xlu0 %51, %v41
    %v53 = vpop.permute.xlu0 %52
    %54 = vset.pattern.permute.xlu0 0
    %55 = vperm.xlu0 %54, %v42
    %v56 = vpop.permute.xlu0 %55
    %vm57 = vcmp.eq.s32.totalorder %v44, %v47
    %vm58 = vcmp.eq.s32.totalorder %v44, %v50
    %vm59 = vcmp.eq.s32.totalorder %v44, %v53
    %vm60 = vcmp.eq.s32.totalorder %v44, %v56
    %v61 = vsel %vm57, 1, 0
    %v62 = vsel %vm58, 1, 0
    %v63 = vsel %vm59, 1, 0
    %v64 = vsel %vm60, 1, 0
    %v65 = vcvt.s32.f32 %v61
    %v66 = vcvt.s32.f32 %v62
    %v67 = vcvt.s32.f32 %v63
    %v68 = vcvt.s32.f32 %v64
    %v69 = vpack.c.bf16 %v66, %v65
    %v70 = vpack.c.bf16 %v68, %v67
    %v71 = vld [vmem:[#allocation3] sm:$0xf]
    %v72 = vld [vmem:[#allocation3 + $0x4] sm:$0xf]
    %v73 = vld [vmem:[%s3] sm:$0x1]
    %v75 = vlaneseq
    %v76 = vshrl.u32 %v75, 7
    %v77 = vsub.s32 0, %v76
    %v78 = vrot.slane %v73, %v77
    %v82 = vunpack.c.l.b16 %v71
    %v83 = vunpack.c.l.b16 %v72
    %v84 = vpack.c.b16 %v83, %v82
    %vm86 = vcmask 130048
    %v88 = vsel %vm86, %v69, 0
    %v91 = vsel %vm86, %v70, 0
    %93 = vmatprep.subr.bf16.mxu0 0
    %94 = vmatpush1.bf16.msra.mxu0 0
    %95 = vmatprep.subr.bf16.mxu0 0
    %96 = vmatpush1.bf16.msra.mxu0 0
    %97 = vmatprep.subr.bf16.mxu0 0
    %98 = vmatpush1.bf16.msra.mxu0 0
    %99 = vmatprep.subr.bf16.mxu0 0
    %100 = vmatpush1.bf16.msra.mxu0 0
    %101 = vmatprep.subr.bf16.mxu0 0
    %102 = vmatpush1.bf16.msra.mxu0 0
    %103 = vmatprep.subr.bf16.mxu0 0
    %104 = vmatpush1.bf16.msra.mxu0 0
    %105 = vmatprep.subr.bf16.mxu0 0
    %106 = vmatpush1.bf16.msra.mxu0 0
    %107 = vmatprep.subr.bf16.mxu0 0
    %108 = vmatpush1.bf16.msra.mxu0 %v84
    %109 = vmatprep.subr.bf16.mxu0 0
    %110 = vmatpush2.bf16.msra.mxu0 0
    %111 = vmatprep.subr.bf16.mxu0 0
    %112 = vmatpush2.bf16.msra.mxu0 0
    %113 = vmatprep.subr.bf16.mxu0 0
    %114 = vmatpush2.bf16.msra.mxu0 0
    %115 = vmatprep.subr.bf16.mxu0 0
    %116 = vmatpush2.bf16.msra.mxu0 0
    %117 = vmatprep.subr.bf16.mxu0 0
    %118 = vmatpush2.bf16.msra.mxu0 0
    %119 = vmatprep.subr.bf16.mxu0 0
    %120 = vmatpush2.bf16.msra.mxu0 0
    %121 = vmatprep.subr.bf16.mxu0 0
    %122 = vmatpush2.bf16.msra.mxu0 0
    %123 = vmatprep.subr.bf16.mxu0 0
    %124 = vmatpush2.bf16.msra.mxu0 0
    %125 = vmatprep.mubr.bf16.mxu0 0
    %126 = vmatmul.mubr.bf16.gmra.mxu0 %v88
    %v127 = vpop.f32.mrf.mxu0
    %v128 = vadd.f32 %v78, %v127
    %v129 = vpop.f32.mrf.mxu0
    %v130 = vpop.f32.mrf.mxu0
    %v131 = vadd.f32 %v78, %v130
    %v132 = vpop.f32.mrf.mxu0
    %133 = vmatprep.mubr.bf16.mxu0 0
    %134 = vmatmul.mubr.bf16.gmra.mxu0 %v91
    %v135 = vpop.f32.mrf.mxu0
    %v136 = vadd.f32 %v78, %v135
    %v137 = vpop.f32.mrf.mxu0
    %v138 = vpop.f32.mrf.mxu0
    %v139 = vadd.f32 %v78, %v138
    %v140 = vpop.f32.mrf.mxu0
    %141 = vdwg.mxu0
    %v142 = vld [vmem:[%s2] sm:$0xf]
    %v143 = vld [vmem:[%s2 + $0x4] sm:$0xf]
    %v144 = vld [vmem:[%s2 + $0x8] sm:$0xf]
    %v145 = vld [vmem:[%s2 + $0xc] sm:$0xf]
    %v150 = vunpack.c.l.b16 %v142
    %v151 = vunpack.c.l.b16 %v143
    %v152 = vunpack.c.l.b16 %v144
    %v153 = vunpack.c.l.b16 %v145
    %v154 = vpack.c.b16 %v151, %v150
    %v155 = vpack.c.b16 %v153, %v152
    %vm158 = vcmask 261120
    %v160 = vsel %vm158, 0, 0
    %162 = vmatprep.subr.bf16.mxu0 0
    %163 = vmatpush1.bf16.msra.mxu0 0
    %164 = vmatprep.subr.bf16.mxu0 0
    %165 = vmatpush1.bf16.msra.mxu0 0
    %166 = vmatprep.subr.bf16.mxu0 0
    %167 = vmatpush1.bf16.msra.mxu0 0
    %168 = vmatprep.subr.bf16.mxu0 0
    %169 = vmatpush1.bf16.msra.mxu0 0
    %170 = vmatprep.subr.bf16.mxu0 0
    %171 = vmatpush1.bf16.msra.mxu0 0
    %172 = vmatprep.subr.bf16.mxu0 0
    %173 = vmatpush1.bf16.msra.mxu0 0
    %174 = vmatprep.subr.bf16.mxu0 0
    %175 = vmatpush1.bf16.msra.mxu0 %v155
    %176 = vmatprep.subr.bf16.mxu0 0
    %177 = vmatpush1.bf16.msra.mxu0 %v154
    %178 = vmatprep.subr.bf16.mxu0 0
    %179 = vmatpush2.bf16.msra.mxu0 0
    %180 = vmatprep.subr.bf16.mxu0 0
    %181 = vmatpush2.bf16.msra.mxu0 0
    %182 = vmatprep.subr.bf16.mxu0 0
    %183 = vmatpush2.bf16.msra.mxu0 0
    %184 = vmatprep.subr.bf16.mxu0 0
    %185 = vmatpush2.bf16.msra.mxu0 0
    %186 = vmatprep.subr.bf16.mxu0 0
    %187 = vmatpush2.bf16.msra.mxu0 0
    %188 = vmatprep.subr.bf16.mxu0 0
    %189 = vmatpush2.bf16.msra.mxu0 0
    %190 = vmatprep.subr.bf16.mxu0 0
    %191 = vmatpush2.bf16.msra.mxu0 0
    %192 = vmatprep.subr.bf16.mxu0 0
    %193 = vmatpush2.bf16.msra.mxu0 0
    %194 = vmatprep.mubr.bf16.mxu0 0
    %195 = vmatmul.mubr.bf16.gmra.mxu0 %v160
    %v196 = vpop.f32.mrf.mxu0
    %v197 = vadd.f32 0.0, %v196
    %v198 = vpop.f32.mrf.mxu0
    %v199 = vpop.f32.mrf.mxu0
    %v200 = vpop.f32.mrf.mxu0
    %201 = vdwg.mxu0
    %v202 = vadd.f32 %v128, %v197
    %v203 = vxor.u32 %v202, 2147483648
    %v204 = vmul.f32 %v203, 1.442695
    %v205 = vpow.pop %v204
    %v206 = vadd.f32 %v205, 1.0
    %v207 = vrcp.pop %v206
    %v208 = vmul.f32 1.0, %v207
    %v209 = vmul.f32 %v208, 2.0
    %v210 = vsub.f32 %v209, 1.0
    %v211 = vmul.f32 %v208, 0.0
    %213 = vrot.lane.b32.xlu0 %v210, 64
    %v214 = vpop.permute.xlu0 %213
    %v216 = vmul.f32 %v208, %v214
    %218 = vrot.lane.b32.xlu0 %v216, 32
    %v219 = vpop.permute.xlu0 %218
    %v221 = vadd.f32 %v211, %v219
    %v222 = vtanh.pop %v221
    %224 = vrot.lane.b32.xlu0 %v222, 64
    %v225 = vpop.permute.xlu0 %224
    %v227 = vmul.f32 %v208, %v225
    %229 = vrot.lane.b32.xlu0 %v227, 32
    %v230 = vpop.permute.xlu0 %229
    %vm232 = vcmask 257024
    %233 = vst.msk [vmem:[#allocation2] sm:$0xf] %vm232, %v230
    %v234 = vpack.c.bf16 %v227, %v227
    %236 = vrot.lane.b32.xlu0 %v234, 32
    %v237 = vpop.permute.xlu0 %236
    %v239 = vsel %vm158, %v237, 0
    %241 = vmatprep.subr.bf16.mxu0 0
    %242 = vmatpush1.bf16.msra.mxu0 0
    %243 = vmatprep.subr.bf16.mxu0 0
    %244 = vmatpush1.bf16.msra.mxu0 0
    %245 = vmatprep.subr.bf16.mxu0 0
    %246 = vmatpush1.bf16.msra.mxu0 0
    %247 = vmatprep.subr.bf16.mxu0 0
    %248 = vmatpush1.bf16.msra.mxu0 0
    %249 = vmatprep.subr.bf16.mxu0 0
    %250 = vmatpush1.bf16.msra.mxu0 0
    %251 = vmatprep.subr.bf16.mxu0 0
    %252 = vmatpush1.bf16.msra.mxu0 0
    %253 = vmatprep.subr.bf16.mxu0 0
    %254 = vmatpush1.bf16.msra.mxu0 %v155
    %255 = vmatprep.subr.bf16.mxu0 0
    %256 = vmatpush1.bf16.msra.mxu0 %v154
    %257 = vmatprep.subr.bf16.mxu0 0
    %258 = vmatpush2.bf16.msra.mxu0 0
    %259 = vmatprep.subr.bf16.mxu0 0
    %260 = vmatpush2.bf16.msra.mxu0 0
    %261 = vmatprep.subr.bf16.mxu0 0
    %262 = vmatpush2.bf16.msra.mxu0 0
    %263 = vmatprep.subr.bf16.mxu0 0
    %264 = vmatpush2.bf16.msra.mxu0 0
    %265 = vmatprep.subr.bf16.mxu0 0
    %266 = vmatpush2.bf16.msra.mxu0 0
    %267 = vmatprep.subr.bf16.mxu0 0
    %268 = vmatpush2.bf16.msra.mxu0 0
    %269 = vmatprep.subr.bf16.mxu0 0
    %270 = vmatpush2.bf16.msra.mxu0 0
    %271 = vmatprep.subr.bf16.mxu0 0
    %272 = vmatpush2.bf16.msra.mxu0 0
    %273 = vmatprep.mubr.bf16.mxu0 0
    %274 = vmatmul.mubr.bf16.gmra.mxu0 %v239
    %v275 = vpop.f32.mrf.mxu0
    %v276 = vadd.f32 0.0, %v275
    %v277 = vpop.f32.mrf.mxu0
    %v278 = vpop.f32.mrf.mxu0
    %v279 = vpop.f32.mrf.mxu0
    %280 = vdwg.mxu0
    %v282 = vrot.slane %v276, 4
    %v284 = vadd.f32 %v128, %v282
    %v285 = vxor.u32 %v284, 2147483648
    %v286 = vmul.f32 %v285, 1.442695
    %v287 = vpow.pop %v286
    %v288 = vadd.f32 %v287, 1.0
    %v289 = vrcp.pop %v288
    %v290 = vmul.f32 1.0, %v289
    %v291 = vmul.f32 %v290, 2.0
    %v292 = vsub.f32 %v291, 1.0
    %v294 = vrot.slane %v221, 4
    %v296 = vmul.f32 %v290, %v294
    %298 = vrot.lane.b32.xlu0 %v292, 64
    %v299 = vpop.permute.xlu0 %298
    %v301 = vmul.f32 %v290, %v299
    %303 = vrot.lane.b32.xlu0 %v301, 32
    %v304 = vpop.permute.xlu0 %303
    %v306 = vadd.f32 %v296, %v304
    %v307 = vtanh.pop %v306
    %309 = vrot.lane.b32.xlu0 %v307, 64
    %v310 = vpop.permute.xlu0 %309
    %v312 = vmul.f32 %v290, %v310
    %314 = vrot.lane.b32.xlu0 %v312, 32
    %v315 = vpop.permute.xlu0 %314
    %vm317 = vcmask 261124
    %318 = vst.msk [vmem:[#allocation2] sm:$0xf0] %vm317, %v315
    %v319 = vpack.c.bf16 %v312, %v312
    %v321 = vrot.slane %v319, 2
    %322 = vrot.lane.b32.xlu0 %v321, 32
    %v323 = vpop.permute.xlu0 %322
    %v325 = vsel %vm158, %v323, 0
    %327 = vmatprep.subr.bf16.mxu0 0
    %328 = vmatpush1.bf16.msra.mxu0 0
    %329 = vmatprep.subr.bf16.mxu0 0
    %330 = vmatpush1.bf16.msra.mxu0 0
    %331 = vmatprep.subr.bf16.mxu0 0
    %332 = vmatpush1.bf16.msra.mxu0 0
    %333 = vmatprep.subr.bf16.mxu0 0
    %334 = vmatpush1.bf16.msra.mxu0 0
    %335 = vmatprep.subr.bf16.mxu0 0
    %336 = vmatpush1.bf16.msra.mxu0 0
    %337 = vmatprep.subr.bf16.mxu0 0
    %338 = vmatpush1.bf16.msra.mxu0 0
    %339 = vmatprep.subr.bf16.mxu0 0
    %340 = vmatpush1.bf16.msra.mxu0 %v155
    %341 = vmatprep.subr.bf16.mxu0 0
    %342 = vmatpush1.bf16.msra.mxu0 %v154
    %343 = vmatprep.subr.bf16.mxu0 0
    %344 = vmatpush2.bf16.msra.mxu0 0
    %345 = vmatprep.subr.bf16.mxu0 0
    %346 = vmatpush2.bf16.msra.mxu0 0
    %347 = vmatprep.subr.bf16.mxu0 0
    %348 = vmatpush2.bf16.msra.mxu0 0
    %349 = vmatprep.subr.bf16.mxu0 0
    %350 = vmatpush2.bf16.msra.mxu0 0
    %351 = vmatprep.subr.bf16.mxu0 0
    %352 = vmatpush2.bf16.msra.mxu0 0
    %353 = vmatprep.subr.bf16.mxu0 0
    %354 = vmatpush2.bf16.msra.mxu0 0
    %355 = vmatprep.subr.bf16.mxu0 0
    %356 = vmatpush2.bf16.msra.mxu0 0
    %357 = vmatprep.subr.bf16.mxu0 0
    %358 = vmatpush2.bf16.msra.mxu0 0
    %359 = vmatprep.mubr.bf16.mxu0 0
    %360 = vmatmul.mubr.bf16.gmra.mxu0 %v325
    %v361 = vpop.f32.mrf.mxu0
    %v362 = vadd.f32 0.0, %v361
    %v363 = vpop.f32.mrf.mxu0
    %v364 = vpop.f32.mrf.mxu0
    %v365 = vpop.f32.mrf.mxu0
    %366 = vdwg.mxu0
    %v367 = vadd.f32 %v131, %v362
    %v368 = vxor.u32 %v367, 2147483648
    %v369 = vmul.f32 %v368, 1.442695
    %v370 = vpow.pop %v369
    %v371 = vadd.f32 %v370, 1.0
    %v372 = vrcp.pop %v371
    %v373 = vmul.f32 1.0, %v372
    %v374 = vmul.f32 %v373, 2.0
    %v375 = vsub.f32 %v374, 1.0
    %v377 = vrot.slane %v306, 4
    %v379 = vmul.f32 %v373, %v377
    %381 = vrot.lane.b32.xlu0 %v375, 64
    %v382 = vpop.permute.xlu0 %381
    %v384 = vmul.f32 %v373, %v382
    %386 = vrot.lane.b32.xlu0 %v384, 32
    %v387 = vpop.permute.xlu0 %386
    %v389 = vadd.f32 %v379, %v387
    %v390 = vtanh.pop %v389
    %392 = vrot.lane.b32.xlu0 %v390, 64
    %v393 = vpop.permute.xlu0 %392
    %v395 = vmul.f32 %v373, %v393
    %397 = vrot.lane.b32.xlu0 %v395, 32
    %v398 = vpop.permute.xlu0 %397
    %400 = vst.msk [vmem:[#allocation2 + $0x8] sm:$0xf] %vm232, %v398
    %v401 = vpack.c.bf16 %v395, %v395
    %403 = vrot.lane.b32.xlu0 %v401, 32
    %v404 = vpop.permute.xlu0 %403
    %v406 = vsel %vm158, %v404, 0
    %408 = vmatprep.subr.bf16.mxu0 0
    %409 = vmatpush1.bf16.msra.mxu0 0
    %410 = vmatprep.subr.bf16.mxu0 0
    %411 = vmatpush1.bf16.msra.mxu0 0
    %412 = vmatprep.subr.bf16.mxu0 0
    %413 = vmatpush1.bf16.msra.mxu0 0
    %414 = vmatprep.subr.bf16.mxu0 0
    %415 = vmatpush1.bf16.msra.mxu0 0
    %416 = vmatprep.subr.bf16.mxu0 0
    %417 = vmatpush1.bf16.msra.mxu0 0
    %418 = vmatprep.subr.bf16.mxu0 0
    %419 = vmatpush1.bf16.msra.mxu0 0
    %420 = vmatprep.subr.bf16.mxu0 0
    %421 = vmatpush1.bf16.msra.mxu0 %v155
    %422 = vmatprep.subr.bf16.mxu0 0
    %423 = vmatpush1.bf16.msra.mxu0 %v154
    %424 = vmatprep.subr.bf16.mxu0 0
    %425 = vmatpush2.bf16.msra.mxu0 0
    %426 = vmatprep.subr.bf16.mxu0 0
    %427 = vmatpush2.bf16.msra.mxu0 0
    %428 = vmatprep.subr.bf16.mxu0 0
    %429 = vmatpush2.bf16.msra.mxu0 0
    %430 = vmatprep.subr.bf16.mxu0 0
    %431 = vmatpush2.bf16.msra.mxu0 0
    %432 = vmatprep.subr.bf16.mxu0 0
    %433 = vmatpush2.bf16.msra.mxu0 0
    %434 = vmatprep.subr.bf16.mxu0 0
    %435 = vmatpush2.bf16.msra.mxu0 0
    %436 = vmatprep.subr.bf16.mxu0 0
    %437 = vmatpush2.bf16.msra.mxu0 0
    %438 = vmatprep.subr.bf16.mxu0 0
    %439 = vmatpush2.bf16.msra.mxu0 0
    %440 = vmatprep.mubr.bf16.mxu0 0
    %441 = vmatmul.mubr.bf16.gmra.mxu0 %v406
    %v442 = vpop.f32.mrf.mxu0
    %v443 = vadd.f32 0.0, %v442
    %v444 = vpop.f32.mrf.mxu0
    %v445 = vpop.f32.mrf.mxu0
    %v446 = vpop.f32.mrf.mxu0
    %447 = vdwg.mxu0
    %v449 = vrot.slane %v443, 4
    %v451 = vadd.f32 %v131, %v449
    %v452 = vxor.u32 %v451, 2147483648
    %v453 = vmul.f32 %v452, 1.442695
    %v454 = vpow.pop %v453
    %v455 = vadd.f32 %v454, 1.0
    %v456 = vrcp.pop %v455
    %v457 = vmul.f32 1.0, %v456
    %v458 = vmul.f32 %v457, 2.0
    %v459 = vsub.f32 %v458, 1.0
    %v461 = vrot.slane %v389, 4
    %v463 = vmul.f32 %v457, %v461
    %465 = vrot.lane.b32.xlu0 %v459, 64
    %v466 = vpop.permute.xlu0 %465
    %v468 = vmul.f32 %v457, %v466
    %470 = vrot.lane.b32.xlu0 %v468, 32
    %v471 = vpop.permute.xlu0 %470
    %v473 = vadd.f32 %v463, %v471
    %v474 = vtanh.pop %v473
    %476 = vrot.lane.b32.xlu0 %v474, 64
    %v477 = vpop.permute.xlu0 %476
    %v479 = vmul.f32 %v457, %v477
    %481 = vrot.lane.b32.xlu0 %v479, 32
    %v482 = vpop.permute.xlu0 %481
    %484 = vst.msk [vmem:[#allocation2 + $0x8] sm:$0xf0] %vm317, %v482
    %v485 = vpack.c.bf16 %v479, %v479
    %v487 = vrot.slane %v485, 2
    %488 = vrot.lane.b32.xlu0 %v487, 32
    %v489 = vpop.permute.xlu0 %488
    %v491 = vsel %vm158, %v489, 0
    %493 = vmatprep.subr.bf16.mxu0 0
    %494 = vmatpush1.bf16.msra.mxu0 0
    %495 = vmatprep.subr.bf16.mxu0 0
    %496 = vmatpush1.bf16.msra.mxu0 0
    %497 = vmatprep.subr.bf16.mxu0 0
    %498 = vmatpush1.bf16.msra.mxu0 0
    %499 = vmatprep.subr.bf16.mxu0 0
    %500 = vmatpush1.bf16.msra.mxu0 0
    %501 = vmatprep.subr.bf16.mxu0 0
    %502 = vmatpush1.bf16.msra.mxu0 0
    %503 = vmatprep.subr.bf16.mxu0 0
    %504 = vmatpush1.bf16.msra.mxu0 0
    %505 = vmatprep.subr.bf16.mxu0 0
    %506 = vmatpush1.bf16.msra.mxu0 %v155
    %507 = vmatprep.subr.bf16.mxu0 0
    %508 = vmatpush1.bf16.msra.mxu0 %v154
    %509 = vmatprep.subr.bf16.mxu0 0
    %510 = vmatpush2.bf16.msra.mxu0 0
    %511 = vmatprep.subr.bf16.mxu0 0
    %512 = vmatpush2.bf16.msra.mxu0 0
    %513 = vmatprep.subr.bf16.mxu0 0
    %514 = vmatpush2.bf16.msra.mxu0 0
    %515 = vmatprep.subr.bf16.mxu0 0
    %516 = vmatpush2.bf16.msra.mxu0 0
    %517 = vmatprep.subr.bf16.mxu0 0
    %518 = vmatpush2.bf16.msra.mxu0 0
    %519 = vmatprep.subr.bf16.mxu0 0
    %520 = vmatpush2.bf16.msra.mxu0 0
    %521 = vmatprep.subr.bf16.mxu0 0
    %522 = vmatpush2.bf16.msra.mxu0 0
    %523 = vmatprep.subr.bf16.mxu0 0
    %524 = vmatpush2.bf16.msra.mxu0 0
    %525 = vmatprep.mubr.bf16.mxu0 0
    %526 = vmatmul.mubr.bf16.gmra.mxu0 %v491
    %v527 = vpop.f32.mrf.mxu0
    %v528 = vadd.f32 0.0, %v527
    %v529 = vpop.f32.mrf.mxu0
    %v530 = vpop.f32.mrf.mxu0
    %v531 = vpop.f32.mrf.mxu0
    %532 = vdwg.mxu0
    %v533 = vadd.f32 %v136, %v528
    %v534 = vxor.u32 %v533, 2147483648
    %v535 = vmul.f32 %v534, 1.442695
    %v536 = vpow.pop %v535
    %v537 = vadd.f32 %v536, 1.0
    %v538 = vrcp.pop %v537
    %v539 = vmul.f32 1.0, %v538
    %v540 = vmul.f32 %v539, 2.0
    %v541 = vsub.f32 %v540, 1.0
    %v543 = vrot.slane %v473, 4
    %v545 = vmul.f32 %v539, %v543
    %547 = vrot.lane.b32.xlu0 %v541, 64
    %v548 = vpop.permute.xlu0 %547
    %v550 = vmul.f32 %v539, %v548
    %552 = vrot.lane.b32.xlu0 %v550, 32
    %v553 = vpop.permute.xlu0 %552
    %v555 = vadd.f32 %v545, %v553
    %v556 = vtanh.pop %v555
    %558 = vrot.lane.b32.xlu0 %v556, 64
    %v559 = vpop.permute.xlu0 %558
    %v561 = vmul.f32 %v539, %v559
    %563 = vrot.lane.b32.xlu0 %v561, 32
    %v564 = vpop.permute.xlu0 %563
    %566 = vst.msk [vmem:[#allocation2 + $0x10] sm:$0xf] %vm232, %v564
    %v567 = vpack.c.bf16 %v561, %v561
    %569 = vrot.lane.b32.xlu0 %v567, 32
    %v570 = vpop.permute.xlu0 %569
    %v572 = vsel %vm158, %v570, 0
    %574 = vmatprep.subr.bf16.mxu0 0
    %575 = vmatpush1.bf16.msra.mxu0 0
    %576 = vmatprep.subr.bf16.mxu0 0
    %577 = vmatpush1.bf16.msra.mxu0 0
    %578 = vmatprep.subr.bf16.mxu0 0
    %579 = vmatpush1.bf16.msra.mxu0 0
    %580 = vmatprep.subr.bf16.mxu0 0
    %581 = vmatpush1.bf16.msra.mxu0 0
    %582 = vmatprep.subr.bf16.mxu0 0
    %583 = vmatpush1.bf16.msra.mxu0 0
    %584 = vmatprep.subr.bf16.mxu0 0
    %585 = vmatpush1.bf16.msra.mxu0 0
    %586 = vmatprep.subr.bf16.mxu0 0
    %587 = vmatpush1.bf16.msra.mxu0 %v155
    %588 = vmatprep.subr.bf16.mxu0 0
    %589 = vmatpush1.bf16.msra.mxu0 %v154
    %590 = vmatprep.subr.bf16.mxu0 0
    %591 = vmatpush2.bf16.msra.mxu0 0
    %592 = vmatprep.subr.bf16.mxu0 0
    %593 = vmatpush2.bf16.msra.mxu0 0
    %594 = vmatprep.subr.bf16.mxu0 0
    %595 = vmatpush2.bf16.msra.mxu0 0
    %596 = vmatprep.subr.bf16.mxu0 0
    %597 = vmatpush2.bf16.msra.mxu0 0
    %598 = vmatprep.subr.bf16.mxu0 0
    %599 = vmatpush2.bf16.msra.mxu0 0
    %600 = vmatprep.subr.bf16.mxu0 0
    %601 = vmatpush2.bf16.msra.mxu0 0
    %602 = vmatprep.subr.bf16.mxu0 0
    %603 = vmatpush2.bf16.msra.mxu0 0
    %604 = vmatprep.subr.bf16.mxu0 0
    %605 = vmatpush2.bf16.msra.mxu0 0
    %606 = vmatprep.mubr.bf16.mxu0 0
    %607 = vmatmul.mubr.bf16.gmra.mxu0 %v572
    %v608 = vpop.f32.mrf.mxu0
    %v609 = vadd.f32 0.0, %v608
    %v610 = vpop.f32.mrf.mxu0
    %v611 = vpop.f32.mrf.mxu0
    %v612 = vpop.f32.mrf.mxu0
    %613 = vdwg.mxu0
    %v615 = vrot.slane %v609, 4
    %v617 = vadd.f32 %v136, %v615
    %v618 = vxor.u32 %v617, 2147483648
    %v619 = vmul.f32 %v618, 1.442695
    %v620 = vpow.pop %v619
    %v621 = vadd.f32 %v620, 1.0
    %v622 = vrcp.pop %v621
    %v623 = vmul.f32 1.0, %v622
    %v624 = vmul.f32 %v623, 2.0
    %v625 = vsub.f32 %v624, 1.0
    %v627 = vrot.slane %v555, 4
    %v629 = vmul.f32 %v623, %v627
    %631 = vrot.lane.b32.xlu0 %v625, 64
    %v632 = vpop.permute.xlu0 %631
    %v634 = vmul.f32 %v623, %v632
    %636 = vrot.lane.b32.xlu0 %v634, 32
    %v637 = vpop.permute.xlu0 %636
    %v639 = vadd.f32 %v629, %v637
    %v640 = vtanh.pop %v639
    %642 = vrot.lane.b32.xlu0 %v640, 64
    %v643 = vpop.permute.xlu0 %642
    %v645 = vmul.f32 %v623, %v643
    %647 = vrot.lane.b32.xlu0 %v645, 32
    %v648 = vpop.permute.xlu0 %647
    %650 = vst.msk [vmem:[#allocation2 + $0x10] sm:$0xf0] %vm317, %v648
    %v651 = vpack.c.bf16 %v645, %v645
    %v653 = vrot.slane %v651, 2
    %654 = vrot.lane.b32.xlu0 %v653, 32
    %v655 = vpop.permute.xlu0 %654
    %v657 = vsel %vm158, %v655, 0
    %659 = vmatprep.subr.bf16.mxu0 0
    %660 = vmatpush1.bf16.msra.mxu0 0
    %661 = vmatprep.subr.bf16.mxu0 0
    %662 = vmatpush1.bf16.msra.mxu0 0
    %663 = vmatprep.subr.bf16.mxu0 0
    %664 = vmatpush1.bf16.msra.mxu0 0
    %665 = vmatprep.subr.bf16.mxu0 0
    %666 = vmatpush1.bf16.msra.mxu0 0
    %667 = vmatprep.subr.bf16.mxu0 0
    %668 = vmatpush1.bf16.msra.mxu0 0
    %669 = vmatprep.subr.bf16.mxu0 0
    %670 = vmatpush1.bf16.msra.mxu0 0
    %671 = vmatprep.subr.bf16.mxu0 0
    %672 = vmatpush1.bf16.msra.mxu0 %v155
    %673 = vmatprep.subr.bf16.mxu0 0
    %674 = vmatpush1.bf16.msra.mxu0 %v154
    %675 = vmatprep.subr.bf16.mxu0 0
    %676 = vmatpush2.bf16.msra.mxu0 0
    %677 = vmatprep.subr.bf16.mxu0 0
    %678 = vmatpush2.bf16.msra.mxu0 0
    %679 = vmatprep.subr.bf16.mxu0 0
    %680 = vmatpush2.bf16.msra.mxu0 0
    %681 = vmatprep.subr.bf16.mxu0 0
    %682 = vmatpush2.bf16.msra.mxu0 0
    %683 = vmatprep.subr.bf16.mxu0 0
    %684 = vmatpush2.bf16.msra.mxu0 0
    %685 = vmatprep.subr.bf16.mxu0 0
    %686 = vmatpush2.bf16.msra.mxu0 0
    %687 = vmatprep.subr.bf16.mxu0 0
    %688 = vmatpush2.bf16.msra.mxu0 0
    %689 = vmatprep.subr.bf16.mxu0 0
    %690 = vmatpush2.bf16.msra.mxu0 0
    %691 = vmatprep.mubr.bf16.mxu0 0
    %692 = vmatmul.mubr.bf16.gmra.mxu0 %v657
    %v693 = vpop.f32.mrf.mxu0
    %v694 = vadd.f32 0.0, %v693
    %v695 = vpop.f32.mrf.mxu0
    %v696 = vpop.f32.mrf.mxu0
    %v697 = vpop.f32.mrf.mxu0
    %698 = vdwg.mxu0
    %v699 = vadd.f32 %v139, %v694
    %v700 = vxor.u32 %v699, 2147483648
    %v701 = vmul.f32 %v700, 1.442695
    %v702 = vpow.pop %v701
    %v703 = vadd.f32 %v702, 1.0
    %v704 = vrcp.pop %v703
    %v705 = vmul.f32 1.0, %v704
    %v706 = vmul.f32 %v705, 2.0
    %v707 = vsub.f32 %v706, 1.0
    %v709 = vrot.slane %v639, 4
    %v711 = vmul.f32 %v705, %v709
    %713 = vrot.lane.b32.xlu0 %v707, 64
    %v714 = vpop.permute.xlu0 %713
    %v716 = vmul.f32 %v705, %v714
    %718 = vrot.lane.b32.xlu0 %v716, 32
    %v719 = vpop.permute.xlu0 %718
    %v721 = vadd.f32 %v711, %v719
    %v722 = vtanh.pop %v721
    %724 = vrot.lane.b32.xlu0 %v722, 64
    %v725 = vpop.permute.xlu0 %724
    %v727 = vmul.f32 %v705, %v725
    %729 = vrot.lane.b32.xlu0 %v727, 32
    %v730 = vpop.permute.xlu0 %729
    %732 = vst.msk [vmem:[#allocation2 + $0x18] sm:$0xf] %vm232, %v730
    %v733 = vpack.c.bf16 %v727, %v727
    %735 = vrot.lane.b32.xlu0 %v733, 32
    %v736 = vpop.permute.xlu0 %735
    %v738 = vsel %vm158, %v736, 0
    %740 = vmatprep.subr.bf16.mxu0 0
    %741 = vmatpush1.bf16.msra.mxu0 0
    %742 = vmatprep.subr.bf16.mxu0 0
    %743 = vmatpush1.bf16.msra.mxu0 0
    %744 = vmatprep.subr.bf16.mxu0 0
    %745 = vmatpush1.bf16.msra.mxu0 0
    %746 = vmatprep.subr.bf16.mxu0 0
    %747 = vmatpush1.bf16.msra.mxu0 0
    %748 = vmatprep.subr.bf16.mxu0 0
    %749 = vmatpush1.bf16.msra.mxu0 0
    %750 = vmatprep.subr.bf16.mxu0 0
    %751 = vmatpush1.bf16.msra.mxu0 0
    %752 = vmatprep.subr.bf16.mxu0 0
    %753 = vmatpush1.bf16.msra.mxu0 %v155
    %754 = vmatprep.subr.bf16.mxu0 0
    %755 = vmatpush1.bf16.msra.mxu0 %v154
    %756 = vmatprep.subr.bf16.mxu0 0
    %757 = vmatpush2.bf16.msra.mxu0 0
    %758 = vmatprep.subr.bf16.mxu0 0
    %759 = vmatpush2.bf16.msra.mxu0 0
    %760 = vmatprep.subr.bf16.mxu0 0
    %761 = vmatpush2.bf16.msra.mxu0 0
    %762 = vmatprep.subr.bf16.mxu0 0
    %763 = vmatpush2.bf16.msra.mxu0 0
    %764 = vmatprep.subr.bf16.mxu0 0
    %765 = vmatpush2.bf16.msra.mxu0 0
    %766 = vmatprep.subr.bf16.mxu0 0
    %767 = vmatpush2.bf16.msra.mxu0 0
    %768 = vmatprep.subr.bf16.mxu0 0
    %769 = vmatpush2.bf16.msra.mxu0 0
    %770 = vmatprep.subr.bf16.mxu0 0
    %771 = vmatpush2.bf16.msra.mxu0 0
    %772 = vmatprep.mubr.bf16.mxu0 0
    %773 = vmatmul.mubr.bf16.gmra.mxu0 %v738
    %v774 = vpop.f32.mrf.mxu0
    %v775 = vadd.f32 0.0, %v774
    %v776 = vpop.f32.mrf.mxu0
    %v777 = vpop.f32.mrf.mxu0
    %v778 = vpop.f32.mrf.mxu0
    %779 = vdwg.mxu0
    %v781 = vrot.slane %v775, 4
    %v783 = vadd.f32 %v139, %v781
    %v784 = vxor.u32 %v783, 2147483648
    %v785 = vmul.f32 %v784, 1.442695
    %v786 = vpow.pop %v785
    %v787 = vadd.f32 %v786, 1.0
    %v788 = vrcp.pop %v787
    %v789 = vmul.f32 1.0, %v788
    %v790 = vmul.f32 %v789, 2.0
    %v791 = vsub.f32 %v790, 1.0
    %v793 = vrot.slane %v721, 4
    %v795 = vmul.f32 %v789, %v793
    %797 = vrot.lane.b32.xlu0 %v791, 64
    %v798 = vpop.permute.xlu0 %797
    %v800 = vmul.f32 %v789, %v798
    %802 = vrot.lane.b32.xlu0 %v800, 32
    %v803 = vpop.permute.xlu0 %802
    %v805 = vadd.f32 %v795, %v803
    %v806 = vtanh.pop %v805
    %808 = vrot.lane.b32.xlu0 %v806, 64
    %v809 = vpop.permute.xlu0 %808
    %v811 = vmul.f32 %v789, %v809
    %813 = vrot.lane.b32.xlu0 %v811, 32
    %v814 = vpop.permute.xlu0 %813
    %816 = vst.msk [vmem:[#allocation2 + $0x18] sm:$0xf0] %vm317, %v814
    %v817 = vld [vmem:[#allocation2] sm:$0xff]
    %v818 = vld [vmem:[#allocation2 + $0x8] sm:$0xff]
    %v819 = vld [vmem:[#allocation2 + $0x10] sm:$0xff]
    %v820 = vld [vmem:[#allocation2 + $0x18] sm:$0xff]
    %v821 = vpack.c.bf16 %v818, %v817
    %v822 = vpack.c.bf16 %v820, %v819
    %v823 = vld [vmem:[%s4] sm:$0xf]
    %v824 = vld [vmem:[%s4 + $0x4] sm:$0xf]
    %v825 = vld [vmem:[%s4 + $0x8] sm:$0xf]
    %v826 = vld [vmem:[%s4 + $0xc] sm:$0xf]
    %v827 = vld [vmem:[%s5] sm:$0x1]
    %v829 = vlaneseq
    %v830 = vshrl.u32 %v829, 7
    %v831 = vsub.s32 0, %v830
    %v832 = vrot.slane %v827, %v831
    %v838 = vunpack.c.l.b16 %v823
    %v839 = vunpack.c.l.b16 %v824
    %v840 = vunpack.c.l.b16 %v825
    %v841 = vunpack.c.l.b16 %v826
    %v842 = vpack.c.b16 %v839, %v838
    %v843 = vpack.c.b16 %v841, %v840
    %v847 = vsel %vm158, %v821, 0
    %v850 = vsel %vm158, %v822, 0
    %852 = vmatprep.subr.bf16.mxu0 0
    %853 = vmatpush1.bf16.msra.mxu0 0
    %854 = vmatprep.subr.bf16.mxu0 0
    %855 = vmatpush1.bf16.msra.mxu0 0
    %856 = vmatprep.subr.bf16.mxu0 0
    %857 = vmatpush1.bf16.msra.mxu0 0
    %858 = vmatprep.subr.bf16.mxu0 0
    %859 = vmatpush1.bf16.msra.mxu0 0
    %860 = vmatprep.subr.bf16.mxu0 0
    %861 = vmatpush1.bf16.msra.mxu0 0
    %862 = vmatprep.subr.bf16.mxu0 0
    %863 = vmatpush1.bf16.msra.mxu0 0
    %864 = vmatprep.subr.bf16.mxu0 0
    %865 = vmatpush1.bf16.msra.mxu0 %v843
    %866 = vmatprep.subr.bf16.mxu0 0
    %867 = vmatpush1.bf16.msra.mxu0 %v842
    %868 = vmatprep.subr.bf16.mxu0 0
    %869 = vmatpush2.bf16.msra.mxu0 0
    %870 = vmatprep.subr.bf16.mxu0 0
    %871 = vmatpush2.bf16.msra.mxu0 0
    %872 = vmatprep.subr.bf16.mxu0 0
    %873 = vmatpush2.bf16.msra.mxu0 0
    %874 = vmatprep.subr.bf16.mxu0 0
    %875 = vmatpush2.bf16.msra.mxu0 0
    %876 = vmatprep.subr.bf16.mxu0 0
    %877 = vmatpush2.bf16.msra.mxu0 0
    %878 = vmatprep.subr.bf16.mxu0 0
    %879 = vmatpush2.bf16.msra.mxu0 0
    %880 = vmatprep.subr.bf16.mxu0 0
    %881 = vmatpush2.bf16.msra.mxu0 0
    %882 = vmatprep.subr.bf16.mxu0 0
    %883 = vmatpush2.bf16.msra.mxu0 0
    %884 = vmatprep.mubr.bf16.mxu0 0
    %885 = vmatmul.mubr.bf16.gmra.mxu0 %v847
    %v886 = vpop.f32.mrf.mxu0
    %v887 = vadd.f32 %v832, %v886
    %v888 = vpop.f32.mrf.mxu0
    %v889 = vpop.f32.mrf.mxu0
    %v890 = vadd.f32 %v832, %v889
    %v891 = vpop.f32.mrf.mxu0
    %892 = vmatprep.mubr.bf16.mxu0 0
    %893 = vmatmul.mubr.bf16.gmra.mxu0 %v850
    %v894 = vpop.f32.mrf.mxu0
    %v895 = vadd.f32 %v832, %v894
    %v896 = vpop.f32.mrf.mxu0
    %v897 = vpop.f32.mrf.mxu0
    %v898 = vadd.f32 %v832, %v897
    %v899 = vpop.f32.mrf.mxu0
    %900 = vdwg.mxu0
    %901 = vmax.xlane.f32.xlu0 %v887
    %v902 = vpop.xlane.xlu0 %901
    %903 = vmax.xlane.f32.xlu0 %v890
    %v904 = vpop.xlane.xlu0 %903
    %905 = vmax.xlane.f32.xlu0 %v895
    %v906 = vpop.xlane.xlu0 %905
    %907 = vmax.xlane.f32.xlu0 %v898
    %v908 = vpop.xlane.xlu0 %907
    %v909 = vsub.f32 %v887, %v902
    %v910 = vsub.f32 %v890, %v904
    %v911 = vsub.f32 %v895, %v906
    %v912 = vsub.f32 %v898, %v908
    %v913 = vmul.f32 %v909, 1.442695
    %v914 = vpow.pop %v913
    %v915 = vmul.f32 %v910, 1.442695
    %v916 = vpow.pop %v915
    %v917 = vmul.f32 %v911, 1.442695
    %v918 = vpow.pop %v917
    %v919 = vmul.f32 %v912, 1.442695
    %v920 = vpow.pop %v919
    %921 = vadd.xlane.f32.xlu0 %v914
    %v922 = vpop.xlane.xlu0 %921
    %923 = vadd.xlane.f32.xlu0 %v916
    %v924 = vpop.xlane.xlu0 %923
    %925 = vadd.xlane.f32.xlu0 %v918
    %v926 = vpop.xlane.xlu0 %925
    %927 = vadd.xlane.f32.xlu0 %v920
    %v928 = vpop.xlane.xlu0 %927
    %v929 = vlog2.pop %v922
    %v930 = vmul.f32 %v929, 0.6931472
    %v931 = vlog2.pop %v924
    %v932 = vmul.f32 %v931, 0.6931472
    %v933 = vlog2.pop %v926
    %v934 = vmul.f32 %v933, 0.6931472
    %v935 = vlog2.pop %v928
    %v936 = vmul.f32 %v935, 0.6931472
    %v937 = vadd.f32 %v930, %v902
    %v938 = vadd.f32 %v932, %v904
    %v939 = vadd.f32 %v934, %v906
    %v940 = vadd.f32 %v936, %v908
    %v941 = vsub.f32 %v887, %v937
    %v942 = vsub.f32 %v890, %v938
    %v943 = vsub.f32 %v895, %v939
    %v944 = vsub.f32 %v898, %v940
    %945 = vst [vmem:[#allocation6] sm:$0xff] %v941
    %946 = vst [vmem:[#allocation6 + $0x8] sm:$0xff] %v942
    %947 = vst [vmem:[#allocation6 + $0x10] sm:$0xff] %v943
    %948 = vst [vmem:[#allocation6 + $0x18] sm:$0xff] %v944
    // Predicated region
    $region30: #{tpu_custom_call.1} parent=1 // pred_check
      _
    $region31: #{tpu_custom_call.1} parent=1 // pred_check_branch
      %950 = sbr.rel (0) target = $region33
    $region32: #{tpu_custom_call.1} parent=1 // pred_region
      %s952 = ssub.s32 512, 512
      %953 = vsyncadd [#allocation5], %s952
      %s954 = sshll.u32 [#allocation6], 4
      %s955 = int_to_ptr.vmem [resolvable:$true] %s954
      %960 = dma.vmem_to_hbm [thread:$0]  %s955, 512, %s6, [#allocation5], 128, 128, 8
    $region33: #{tpu_custom_call.1} parent=1 // pred_fallthru
      _
    // Predicated region
    $region34: #{tpu_custom_call.1} parent=1 // pred_check
      _
    $region35: #{tpu_custom_call.1} parent=1 // pred_check_branch
      %962 = sbr.rel (0) target = $region37
    $region36: #{tpu_custom_call.1} parent=1 // pred_region
      %963 = dma.done [#allocation5], 512
    $region37: #{tpu_custom_call.1} parent=1 // pred_fallthru
      _
    %964 = vsyncpa [#allocation4], 1
    %965 = vsyncpa [#allocation5], 1

</llo_original>
